<compile_context>
chip_gen: v7x
topology: tpu7x:2x2x1
jax: 0.10.0
libtpu: 0.0.40
codegen_flags: <defaults>
</compile_context>

<pallas_src>
import functools

import jax
import jax.numpy as jnp
from jax import lax
from jax.experimental import pallas as pl
from jax.experimental.pallas import tpu as pltpu


# ----------------------------------------------------------------------------
# Fused kernel: all Gramba blocks + LayerNorm + classifier head.
#   per layer (x resident in VMEM across layers):
#     z       = sigmoid(x2d @ Wz)        (bf16 operands, f32 accumulate)
#     h~      = x2d @ Wh
#     h_t     = (1 - z_t) * h_{t-1} + z_t * h~_t   (roll/mask doubling scan)
#     x       = x + h                               (residual)
#   epilogue (last layer):
#     logits  = LayerNorm(x[:, -1, :]) @ Wc + bc   (lane-dense padded output)
# ----------------------------------------------------------------------------
def gramba_fused_kernel(x_ref, w_ref, gamma_ref, beta_ref, cw_ref, cb_ref,
                        o_ref, act_ref, *, num_layers, seq_len, dim):
    layer = pl.program_id(1)
    L, D = seq_len, dim

    # Layer 0 of each batch tile: load the embeddings into resident VMEM state.
    @pl.when(layer == 0)
    def _():
        act_ref[...] = x_ref[...].astype(jnp.float32)

    x = act_ref[...]                                   # (BT, L, D) f32
    BT = x.shape[0]

    # MXU matmuls in bf16 with f32 accumulation (Wz / Wh kept separate so no
    # lane-split at a non-128 boundary when D < 128).
    x2d = x.reshape(BT * L, D).astype(jnp.bfloat16)
    z = jax.nn.sigmoid(
        jnp.dot(x2d, w_ref[0, 0], preferred_element_type=jnp.float32)
    ).reshape(BT, L, D)
    h_tilde = jnp.dot(
        x2d, w_ref[0, 1], preferred_element_type=jnp.float32
    ).reshape(BT, L, D)

    # Linear recurrence h_t = a_t * h_{t-1} + b_t with h_{-1} = 0,
    # a_t = 1 - z_t, b_t = z_t * h~_t.  Hillis–Steele doubling scan over L
    # using XLU sublane rotates + masked selects (no concat copies).
    a = 1.0 - z
    b = z * h_tilde
    pos = lax.broadcasted_iota(jnp.int32, (1, L, D), 1)   # sublane index
    d = 1
    while d < L:                                        # static Python unroll
        keep = pos >= d                                 # rows with a d-back neighbor
        a_prev = jnp.where(keep, pltpu.roll(a, shift=d, axis=1), 1.0)
        b_prev = jnp.where(keep, pltpu.roll(b, shift=d, axis=1), 0.0)
        b = b + a * b_prev
        a = a * a_prev
        d *= 2

    act_new = x + b                                     # residual connection
    act_ref[...] = act_new

    # Epilogue on the last layer: LayerNorm(last token) @ Wc + bc.
    @pl.when(layer == num_layers - 1)
    def _():
        last = act_new[:, L - 1, :]                     # (BT, D)
        mean = jnp.mean(last, axis=-1, keepdims=True)
        var = jnp.mean(jnp.square(last - mean), axis=-1, keepdims=True)
        xn = (last - mean) * lax.rsqrt(var + 1e-5)
        xn = xn * gamma_ref[...] + beta_ref[...]        # (1, D) broadcast
        logits = jnp.dot(xn, cw_ref[...],
                         preferred_element_type=jnp.float32) + cb_ref[...]
        o_ref[...] = logits.astype(o_ref.dtype)


def _vmem_capacity_bytes():
    try:
        cap = getattr(pltpu.get_tpu_info(), "vmem_capacity_bytes", None)
        if cap:
            return int(cap)
    except Exception:
        pass
    return 64 * 1024 * 1024          # conservative fallback (v7x per-TC)


def gramba_sequence_classification(token_ids, params, attention_mask=None,
                                   *, block_b=None):
    """Embedding lookup (plain JAX gather) + fused Pallas model."""
    x = jnp.take(params["embedding"], token_ids, axis=0)        # (B, L, D) f32
    if attention_mask is not None:
        x = x * attention_mask[..., None].astype(x.dtype)

    B, L, D = x.shape
    w_zh = params["w_zh"]                                        # (NL, 2, D, D) bf16
    num_layers = w_zh.shape[0]
    C = params["cls_w"].shape[1]

    # Lane-dense classifier output: pad C up to a multiple of 128.
    CP = ((C + 127) // 128) * 128
    cls_w_p = jnp.zeros((D, CP), jnp.float32).at[:, :C].set(params["cls_w"])
    cls_b_p = jnp.zeros((1, CP), jnp.float32).at[:, :C].set(params["cls_b"])

    # VMEM budget: ~3/4 of physical (≈48 MiB on v7x, ≈96 MiB on v5e/v6e).
    vmem_limit = min(_vmem_capacity_bytes() * 3 // 4, 100 * 1024 * 1024)

    # Batch tiling ("parallel" axis -> shards across the two TensorCores on
    # v7x). Default: 2 tiles when the resulting tile stays sublane-aligned
    # (>= 8 rows for the (block_b, CP) output block), then cap against VMEM
    # (the scan keeps ~a dozen full (BT,L,D) f32 tensors live).
    if block_b is None:
        block_b = B // 2 if (B % 16 == 0) else B
        per_row_bytes = 16 * L * D * 4
        while (block_b >= 16 and block_b % 2 == 0
               and block_b * per_row_bytes > vmem_limit * 7 // 10):
            block_b //= 2
    assert B % block_b == 0, "block_b must divide B"
    nb = B // block_b

    kernel = functools.partial(gramba_fused_kernel, num_layers=num_layers,
                               seq_len=L, dim=D)

    logits_p = pl.pallas_call(
        kernel,
        out_shape=jax.ShapeDtypeStruct((B, CP), jnp.float32),
        grid=(nb, num_layers),
        in_specs=[
            pl.BlockSpec((block_b, L, D), lambda b, l: (b, 0, 0)),   # x
            pl.BlockSpec((1, 2, D, D), lambda b, l: (l, 0, 0, 0)),   # Wz/Wh[l]
            pl.BlockSpec((1, D), lambda b, l: (0, 0)),               # ln gamma
            pl.BlockSpec((1, D), lambda b, l: (0, 0)),               # ln beta
            pl.BlockSpec((D, CP), lambda b, l: (0, 0)),              # cls W
            pl.BlockSpec((1, CP), lambda b, l: (0, 0)),              # cls b
        ],
        out_specs=pl.BlockSpec((block_b, CP), lambda b, l: (b, 0)),
        scratch_shapes=[pltpu.VMEM((block_b, L, D), jnp.float32)],
        compiler_params=pltpu.CompilerParams(
            dimension_semantics=("parallel", "arbitrary"),
            vmem_limit_bytes=int(vmem_limit)),
    )(x, w_zh, params["ln_gamma"], params["ln_beta"], cls_w_p, cls_b_p)

    return logits_p[:, :C]


# ----------------------------------------------------------------------------
# Pure-JAX reference (sequential scan, same bf16-matmul numerics) for checking.
# ----------------------------------------------------------------------------
def reference_forward(token_ids, params, attention_mask=None):
    x = jnp.take(params["embedding"], token_ids, axis=0)
    if attention_mask is not None:
        x = x * attention_mask[..., None].astype(x.dtype)
    B, L, D = x.shape
    for wl in params["w_zh"]:                              # wl: (2, D, D) bf16
        xb = x.astype(jnp.bfloat16)
        z = jax.nn.sigmoid(jnp.dot(xb, wl[0], preferred_element_type=jnp.float32))
        h_tilde = jnp.dot(xb, wl[1], preferred_element_type=jnp.float32)

        def step(h_prev, zt_ht):
            z_t, ht_t = zt_ht
            h = (1.0 - z_t) * h_prev + z_t * ht_t
            return h, h

        _, hs = lax.scan(step, jnp.zeros((B, D), jnp.float32),
                         (jnp.swapaxes(z, 0, 1), jnp.swapaxes(h_tilde, 0, 1)))
        x = x + jnp.swapaxes(hs, 0, 1)
    last = x[:, -1, :]
    mean = last.mean(-1, keepdims=True)
    var = jnp.square(last - mean).mean(-1, keepdims=True)
    xn = (last - mean) / jnp.sqrt(var + 1e-5)
    xn = xn * params["ln_gamma"] + params["ln_beta"]
    return xn @ params["cls_w"] + params["cls_b"]


def init_params(key, vocab_size, embedding_dim, num_classes, num_layers):
    k_emb, k_cls, k_blk = jax.random.split(key, 3)
    return {
        "embedding": 0.02 * jax.random.normal(
            k_emb, (vocab_size, embedding_dim), jnp.float32),
        "ln_gamma": jnp.ones((1, embedding_dim), jnp.float32),
        "ln_beta": jnp.zeros((1, embedding_dim), jnp.float32),
        "cls_w": 0.02 * jax.random.normal(
            k_cls, (embedding_dim, num_classes), jnp.float32),
        "cls_b": jnp.zeros((1, num_classes), jnp.float32),
        # Per-layer Wz / Wh stacked as (NL, 2, D, D), stored bf16 for the MXU.
        "w_zh": (0.1 * jax.random.normal(
            k_blk, (num_layers, 2, embedding_dim, embedding_dim),
            jnp.float32)).astype(jnp.bfloat16),
    }


if __name__ == "__main__":
    batch, seq_len = 2, 8
    vocab_size, embedding_dim, num_classes, num_layers = 100, 32, 4, 2

    key = jax.random.PRNGKey(0)
    k_tok, k_param = jax.random.split(key)

    token_ids = jax.random.randint(k_tok, (batch, seq_len), 0, vocab_size,
                                   dtype=jnp.int32)
    params = init_params(k_param, vocab_size, embedding_dim, num_classes,
                         num_layers)

    logits = gramba_sequence_classification(token_ids, params,
                                            attention_mask=None)
    logits = jax.block_until_ready(logits)
    assert logits.shape == (batch, num_classes)

    ref = reference_forward(token_ids, params, attention_mask=None)
    assert bool(jnp.all(jnp.isfinite(logits)))
    assert bool(jnp.allclose(logits, ref, atol=2e-3, rtol=2e-3)), (logits, ref)
    print("KERNEL_OK")
</pallas_src>

<mosaic_0001>
module attributes {stable_mosaic.version = 11 : i64} {
  func.func @gramba_fused_kernel(%arg0: i32, %arg1: i32, %arg2: memref<2x8x32xf32, #tpu.memory_space<vmem>>, %arg3: memref<1x2x32x32xbf16, #tpu.memory_space<vmem>>, %arg4: memref<1x32xf32, #tpu.memory_space<vmem>>, %arg5: memref<1x32xf32, #tpu.memory_space<vmem>>, %arg6: memref<32x128xf32, #tpu.memory_space<vmem>>, %arg7: memref<1x128xf32, #tpu.memory_space<vmem>>, %arg8: memref<2x128xf32, #tpu.memory_space<vmem>>, %arg9: memref<2x8x32xf32, #tpu.memory_space<vmem>>) attributes {dimension_semantics = [#tpu.dimension_semantics<parallel>, #tpu.dimension_semantics<arbitrary>], iteration_bounds = array<i64: 1, 2>, scalar_prefetch = 0 : i64, scratch_operands = 1 : i64, tpu.core_type = #tpu.core_type<tc>, window_params = [{transform_indices = @transform_0, window_bounds = array<i64: 2, 8, 32>}, {transform_indices = @transform_1, window_bounds = array<i64: 1, 2, 32, 32>}, {pipeline_mode = #tpu.pipeline_mode<synchronous>, transform_indices = @transform_2, window_bounds = array<i64: 1, 32>}, {pipeline_mode = #tpu.pipeline_mode<synchronous>, transform_indices = @transform_3, window_bounds = array<i64: 1, 32>}, {pipeline_mode = #tpu.pipeline_mode<synchronous>, transform_indices = @transform_4, window_bounds = array<i64: 32, 128>}, {pipeline_mode = #tpu.pipeline_mode<synchronous>, transform_indices = @transform_5, window_bounds = array<i64: 1, 128>}, {transform_indices = @transform_6, window_bounds = array<i64: 2, 128>}]} {
    %c0_i32 = arith.constant 0 : i32
    %0 = arith.cmpi eq, %arg1, %c0_i32 : i32
    %1 = arith.extui %0 : i1 to i32
    %c0_i32_0 = arith.constant 0 : i32
    %2 = arith.cmpi ne, %1, %c0_i32_0 : i32
    scf.if %2 {
      %c0_28 = arith.constant 0 : index
      %c0_29 = arith.constant 0 : index
      %c0_30 = arith.constant 0 : index
      %67 = vector.load %arg2[%c0_28, %c0_29, %c0_30] : memref<2x8x32xf32, #tpu.memory_space<vmem>>, vector<2x8x32xf32>
      %c0_31 = arith.constant 0 : index
      %c0_32 = arith.constant 0 : index
      %c0_33 = arith.constant 0 : index
      %68 = vector.load %arg9[%c0_31, %c0_32, %c0_33] : memref<2x8x32xf32, #tpu.memory_space<vmem>>, vector<2x8x32xf32>
      tpu.vector_store %arg9[%c0_31, %c0_32, %c0_33], %67 {strides = array<i32>} : memref<2x8x32xf32, #tpu.memory_space<vmem>>, vector<2x8x32xf32>,
    } else {
    }
    %c0 = arith.constant 0 : index
    %c0_1 = arith.constant 0 : index
    %c0_2 = arith.constant 0 : index
    %3 = vector.load %arg9[%c0, %c0_1, %c0_2] : memref<2x8x32xf32, #tpu.memory_space<vmem>>, vector<2x8x32xf32>
    %4 = vector.shape_cast %3 : vector<2x8x32xf32> to vector<16x32xf32>
    %5 = arith.truncf %4 : vector<16x32xf32> to vector<16x32xbf16>
    %c0_3 = arith.constant 0 : index
    %c0_4 = arith.constant 0 : index
    %c0_5 = arith.constant 0 : index
    %c0_6 = arith.constant 0 : index
    %6 = vector.load %arg3[%c0_3, %c0_4, %c0_5, %c0_6] : memref<1x2x32x32xbf16, #tpu.memory_space<vmem>>, vector<1x1x32x32xbf16>
    %7 = vector.shape_cast %6 : vector<1x1x32x32xbf16> to vector<32x32xbf16>
    %cst = arith.constant dense<0.000000e+00> : vector<16x32xf32>
    %8 = tpu.matmul %5, %7, %cst {dimension_numbers = #tpu.dot_dimension_numbers<[1], [0], [0], [1], [0, 0, 1, 1], [], []>} : vector<16x32xbf16>, vector<32x32xbf16>, vector<16x32xf32> -> vector<16x32xf32>
    %9 = arith.negf %8 : vector<16x32xf32>
    %10 = math.exp %9 : vector<16x32xf32>
    %cst_7 = arith.constant 1.000000e+00 : f32
    %11 = vector.broadcast %cst_7 : f32 to vector<16x32xf32>
    %12 = arith.addf %11, %10 : vector<16x32xf32>
    %13 = arith.divf %11, %12 : vector<16x32xf32>
    %14 = vector.shape_cast %13 : vector<16x32xf32> to vector<2x8x32xf32>
    %c0_8 = arith.constant 0 : index
    %c1 = arith.constant 1 : index
    %c0_9 = arith.constant 0 : index
    %c0_10 = arith.constant 0 : index
    %15 = vector.load %arg3[%c0_8, %c1, %c0_9, %c0_10] : memref<1x2x32x32xbf16, #tpu.memory_space<vmem>>, vector<1x1x32x32xbf16>
    %16 = vector.shape_cast %15 : vector<1x1x32x32xbf16> to vector<32x32xbf16>
    %cst_11 = arith.constant dense<0.000000e+00> : vector<16x32xf32>
    %17 = tpu.matmul %5, %16, %cst_11 {dimension_numbers = #tpu.dot_dimension_numbers<[1], [0], [0], [1], [0, 0, 1, 1], [], []>} : vector<16x32xbf16>, vector<32x32xbf16>, vector<16x32xf32> -> vector<16x32xf32>
    %18 = vector.shape_cast %17 : vector<16x32xf32> to vector<2x8x32xf32>
    %cst_12 = arith.constant 1.000000e+00 : f32
    %19 = vector.broadcast %cst_12 : f32 to vector<2x8x32xf32>
    %20 = arith.subf %19, %14 : vector<2x8x32xf32>
    %21 = arith.mulf %14, %18 : vector<2x8x32xf32>
    %22 = tpu.iota {dimensions = array<i32: 1>} : vector<1x8x32xi32>
    %c1_i32 = arith.constant 1 : i32
    %23 = vector.broadcast %c1_i32 : i32 to vector<1x8x32xi32>
    %24 = arith.cmpi sge, %22, %23 : vector<1x8x32xi32>
    %c1_i32_13 = arith.constant 1 : i32
    %25 = tpu.dynamic_rotate %20 by %c1_i32_13 dim 1 : vector<2x8x32xf32>, i32 -> vector<2x8x32xf32>
    %cst_14 = arith.constant 1.000000e+00 : f32
    %26 = vector.shape_cast %24 : vector<1x8x32xi1> to vector<1x8x32xi1>
    %27 = vector.broadcast %26 : vector<1x8x32xi1> to vector<2x8x32xi1>
    %28 = vector.broadcast %cst_14 : f32 to vector<2x8x32xf32>
    %29 = arith.select %27, %25, %28 : vector<2x8x32xi1>, vector<2x8x32xf32>
    %c1_i32_15 = arith.constant 1 : i32
    %30 = tpu.dynamic_rotate %21 by %c1_i32_15 dim 1 : vector<2x8x32xf32>, i32 -> vector<2x8x32xf32>
    %cst_16 = arith.constant 0.000000e+00 : f32
    %31 = vector.shape_cast %24 : vector<1x8x32xi1> to vector<1x8x32xi1>
    %32 = vector.broadcast %31 : vector<1x8x32xi1> to vector<2x8x32xi1>
    %33 = vector.broadcast %cst_16 : f32 to vector<2x8x32xf32>
    %34 = arith.select %32, %30, %33 : vector<2x8x32xi1>, vector<2x8x32xf32>
    %35 = arith.mulf %20, %34 : vector<2x8x32xf32>
    %36 = arith.addf %21, %35 : vector<2x8x32xf32>
    %37 = arith.mulf %20, %29 : vector<2x8x32xf32>
    %c2_i32 = arith.constant 2 : i32
    %38 = vector.broadcast %c2_i32 : i32 to vector<1x8x32xi32>
    %39 = arith.cmpi sge, %22, %38 : vector<1x8x32xi32>
    %c2_i32_17 = arith.constant 2 : i32
    %40 = tpu.dynamic_rotate %37 by %c2_i32_17 dim 1 : vector<2x8x32xf32>, i32 -> vector<2x8x32xf32>
    %cst_18 = arith.constant 1.000000e+00 : f32
    %41 = vector.shape_cast %39 : vector<1x8x32xi1> to vector<1x8x32xi1>
    %42 = vector.broadcast %41 : vector<1x8x32xi1> to vector<2x8x32xi1>
    %43 = vector.broadcast %cst_18 : f32 to vector<2x8x32xf32>
    %44 = arith.select %42, %40, %43 : vector<2x8x32xi1>, vector<2x8x32xf32>
    %c2_i32_19 = arith.constant 2 : i32
    %45 = tpu.dynamic_rotate %36 by %c2_i32_19 dim 1 : vector<2x8x32xf32>, i32 -> vector<2x8x32xf32>
    %cst_20 = arith.constant 0.000000e+00 : f32
    %46 = vector.shape_cast %39 : vector<1x8x32xi1> to vector<1x8x32xi1>
    %47 = vector.broadcast %46 : vector<1x8x32xi1> to vector<2x8x32xi1>
    %48 = vector.broadcast %cst_20 : f32 to vector<2x8x32xf32>
    %49 = arith.select %47, %45, %48 : vector<2x8x32xi1>, vector<2x8x32xf32>
    %50 = arith.mulf %37, %49 : vector<2x8x32xf32>
    %51 = arith.addf %36, %50 : vector<2x8x32xf32>
    %52 = arith.mulf %37, %44 : vector<2x8x32xf32>
    %c4_i32 = arith.constant 4 : i32
    %53 = vector.broadcast %c4_i32 : i32 to vector<1x8x32xi32>
    %54 = arith.cmpi sge, %22, %53 : vector<1x8x32xi32>
    %c4_i32_21 = arith.constant 4 : i32
    %55 = tpu.dynamic_rotate %51 by %c4_i32_21 dim 1 : vector<2x8x32xf32>, i32 -> vector<2x8x32xf32>
    %cst_22 = arith.constant 0.000000e+00 : f32
    %56 = vector.shape_cast %54 : vector<1x8x32xi1> to vector<1x8x32xi1>
    %57 = vector.broadcast %56 : vector<1x8x32xi1> to vector<2x8x32xi1>
    %58 = vector.broadcast %cst_22 : f32 to vector<2x8x32xf32>
    %59 = arith.select %57, %55, %58 : vector<2x8x32xi1>, vector<2x8x32xf32>
    %60 = arith.mulf %52, %59 : vector<2x8x32xf32>
    %61 = arith.addf %51, %60 : vector<2x8x32xf32>
    %62 = arith.addf %3, %61 : vector<2x8x32xf32>
    %c0_23 = arith.constant 0 : index
    %c0_24 = arith.constant 0 : index
    %c0_25 = arith.constant 0 : index
    %63 = vector.load %arg9[%c0_23, %c0_24, %c0_25] : memref<2x8x32xf32, #tpu.memory_space<vmem>>, vector<2x8x32xf32>
    tpu.vector_store %arg9[%c0_23, %c0_24, %c0_25], %62 {strides = array<i32>} : memref<2x8x32xf32, #tpu.memory_space<vmem>>, vector<2x8x32xf32>,
    %c1_i32_26 = arith.constant 1 : i32
    %64 = arith.cmpi eq, %arg1, %c1_i32_26 : i32
    %65 = arith.extui %64 : i1 to i32
    %c0_i32_27 = arith.constant 0 : i32
    %66 = arith.cmpi ne, %65, %c0_i32_27 : i32
    scf.if %66 {
      %67 = vector.extract_strided_slice %62 {offsets = [0, 7, 0], sizes = [2, 1, 32], strides = [1, 1, 1]} : vector<2x8x32xf32> to vector<2x1x32xf32>
      %68 = vector.shape_cast %67 : vector<2x1x32xf32> to vector<2x32xf32>
      %cst_28 = arith.constant dense<0.000000e+00> : vector<2xf32>
      %69 = vector.multi_reduction <add>, %68, %cst_28 [1] : vector<2x32xf32> to vector<2xf32>
      %70 = vector.shape_cast %69 : vector<2xf32> to vector<2x1xf32>
      %cst_29 = arith.constant 3.200000e+01 : f32
      %71 = vector.broadcast %cst_29 : f32 to vector<2x1xf32>
      %72 = arith.divf %70, %71 : vector<2x1xf32>
      %73 = vector.broadcast %72 : vector<2x1xf32> to vector<2x32xf32>
      %74 = arith.subf %68, %73 : vector<2x32xf32>
      %75 = arith.mulf %74, %74 : vector<2x32xf32>
      %cst_30 = arith.constant dense<0.000000e+00> : vector<2xf32>
      %76 = vector.multi_reduction <add>, %75, %cst_30 [1] : vector<2x32xf32> to vector<2xf32>
      %77 = vector.shape_cast %76 : vector<2xf32> to vector<2x1xf32>
      %cst_31 = arith.constant 3.200000e+01 : f32
      %78 = vector.broadcast %cst_31 : f32 to vector<2x1xf32>
      %79 = arith.divf %77, %78 : vector<2x1xf32>
      %80 = vector.broadcast %72 : vector<2x1xf32> to vector<2x32xf32>
      %81 = arith.subf %68, %80 : vector<2x32xf32>
      %cst_32 = arith.constant 9.99999974E-6 : f32
      %82 = vector.broadcast %cst_32 : f32 to vector<2x1xf32>
      %83 = arith.addf %79, %82 : vector<2x1xf32>
      %84 = math.rsqrt %83 : vector<2x1xf32>
      %85 = vector.broadcast %84 : vector<2x1xf32> to vector<2x32xf32>
      %86 = arith.mulf %81, %85 : vector<2x32xf32>
      %c0_33 = arith.constant 0 : index
      %c0_34 = arith.constant 0 : index
      %87 = vector.load %arg4[%c0_33, %c0_34] : memref<1x32xf32, #tpu.memory_space<vmem>>, vector<1x32xf32>
      %88 = vector.broadcast %87 : vector<1x32xf32> to vector<2x32xf32>
      %89 = arith.mulf %86, %88 : vector<2x32xf32>
      %c0_35 = arith.constant 0 : index
      %c0_36 = arith.constant 0 : index
      %90 = vector.load %arg5[%c0_35, %c0_36] : memref<1x32xf32, #tpu.memory_space<vmem>>, vector<1x32xf32>
      %91 = vector.broadcast %90 : vector<1x32xf32> to vector<2x32xf32>
      %92 = arith.addf %89, %91 : vector<2x32xf32>
      %c0_37 = arith.constant 0 : index
      %c0_38 = arith.constant 0 : index
      %93 = vector.load %arg6[%c0_37, %c0_38] : memref<32x128xf32, #tpu.memory_space<vmem>>, vector<32x128xf32>
      %cst_39 = arith.constant dense<0.000000e+00> : vector<2x128xf32>
      %94 = tpu.matmul %92, %93, %cst_39 {dimension_numbers = #tpu.dot_dimension_numbers<[1], [0], [0], [1], [0, 0, 1, 1], [], []>} : vector<2x32xf32>, vector<32x128xf32>, vector<2x128xf32> -> vector<2x128xf32>
      %c0_40 = arith.constant 0 : index
      %c0_41 = arith.constant 0 : index
      %95 = vector.load %arg7[%c0_40, %c0_41] : memref<1x128xf32, #tpu.memory_space<vmem>>, vector<1x128xf32>
      %96 = vector.broadcast %95 : vector<1x128xf32> to vector<2x128xf32>
      %97 = arith.addf %94, %96 : vector<2x128xf32>
      %c0_42 = arith.constant 0 : index
      %c0_43 = arith.constant 0 : index
      %98 = vector.load %arg8[%c0_42, %c0_43] : memref<2x128xf32, #tpu.memory_space<vmem>>, vector<2x128xf32>
      tpu.vector_store %arg8[%c0_42, %c0_43], %97 {strides = array<i32>} : memref<2x128xf32, #tpu.memory_space<vmem>>, vector<2x128xf32>,
    } else {
    }
    return
  }
  func.func @transform_0(%arg0: i32, %arg1: i32) -> (i32, i32, i32) {
    %c0_i32 = arith.constant 0 : i32
    %c0_i32_0 = arith.constant 0 : i32
    %c0_i32_1 = arith.constant 0 : i32
    return %arg0, %c0_i32, %c0_i32_0 : i32, i32, i32
  }
  func.func @transform_1(%arg0: i32, %arg1: i32) -> (i32, i32, i32, i32) {
    %c0_i32 = arith.constant 0 : i32
    %c0_i32_0 = arith.constant 0 : i32
    %c0_i32_1 = arith.constant 0 : i32
    %c0_i32_2 = arith.constant 0 : i32
    return %arg1, %c0_i32, %c0_i32_0, %c0_i32_1 : i32, i32, i32, i32
  }
  func.func @transform_2(%arg0: i32, %arg1: i32) -> (i32, i32) {
    %c0_i32 = arith.constant 0 : i32
    %c0_i32_0 = arith.constant 0 : i32
    %c0_i32_1 = arith.constant 0 : i32
    return %c0_i32, %c0_i32_0 : i32, i32
  }
  func.func @transform_3(%arg0: i32, %arg1: i32) -> (i32, i32) {
    %c0_i32 = arith.constant 0 : i32
    %c0_i32_0 = arith.constant 0 : i32
    %c0_i32_1 = arith.constant 0 : i32
    return %c0_i32, %c0_i32_0 : i32, i32
  }
  func.func @transform_4(%arg0: i32, %arg1: i32) -> (i32, i32) {
    %c0_i32 = arith.constant 0 : i32
    %c0_i32_0 = arith.constant 0 : i32
    %c0_i32_1 = arith.constant 0 : i32
    return %c0_i32, %c0_i32_0 : i32, i32
  }
  func.func @transform_5(%arg0: i32, %arg1: i32) -> (i32, i32) {
    %c0_i32 = arith.constant 0 : i32
    %c0_i32_0 = arith.constant 0 : i32
    %c0_i32_1 = arith.constant 0 : i32
    return %c0_i32, %c0_i32_0 : i32, i32
  }
  func.func @transform_6(%arg0: i32, %arg1: i32) -> (i32, i32) {
    %c0_i32 = arith.constant 0 : i32
    %c0_i32_0 = arith.constant 0 : i32
    return %arg0, %c0_i32 : i32, i32
  }
}

</mosaic_0001>

<llo_original>
// kernel: tpu_custom_call.1
$region0: #{tpu_custom_call.1}
  #allocation0 [shape = 'u32[]', space=smem, size = 0x4, offset = 0x4, fixed_abs, tag = 'smem constant byte address 0x4 - core index']
  #allocation1 [shape = 'u32[144,128]{1,0:T(1,128)}', space=vmem, size = 0x12000, scoped, tag = 'internal scratch']
  #allocation2 [shape = 'f32[2,8,32]{2,1,0:T(8,128)}', space=vmem, size = 0x2000, scoped, tag = 'scratch operand']
  %s0 = inlined_call_operand.hbm [shape: f32[2,8,32], index: 0, kind: input, shape index: {}]
  %s1 = inlined_call_operand.hbm [shape: bf16[2,2,32,32], index: 1, kind: input, shape index: {}]
  %s2 = inlined_call_operand.vmem [shape: f32[1,32], index: 2, kind: input, shape index: {}]
  %s3 = inlined_call_operand.vmem [shape: f32[1,32], index: 3, kind: input, shape index: {}]
  %s4 = inlined_call_operand.hbm [shape: f32[32,128], index: 4, kind: input, shape index: {}]
  %s5 = inlined_call_operand.vmem [shape: f32[1,128], index: 5, kind: input, shape index: {}]
  %s6 = inlined_call_operand.hbm [shape: f32[2,128], index: 6, kind: output, shape index: {}]
  %s7 = sld [smem:[#allocation0]]
  $region77: #{tpu_custom_call.1} parent=0
    _
  %s9 = ssub.s32 1, %s7
  %s10 = scalar_select 0, %s9, %s7
  $region1: #{tpu_custom_call.1} parent=0
    #allocation3 [shape = 'u8[8192]{0}', space=vmem, size = 0x2000, scoped, tag = 'input window, operand 0, single buffered']
    #allocation4 [shape = 's32[2]{0}', space=sflag, size = 0x8, scoped, tag = 'scoped memory for tpu_custom_call.1']
    #allocation5 [shape = 's32[2]{0}', space=sflag, size = 0x8, scoped, tag = 'scoped memory for tpu_custom_call.1']
    #allocation6 [shape = 'u8[32768]{0}', space=vmem, size = 0x8000, scoped, tag = 'input window, operand 1']
    #allocation7 [shape = 's32[2]{0}', space=sflag, size = 0x8, scoped, tag = 'scoped memory for tpu_custom_call.1']
    #allocation8 [shape = 'u8[16384]{0}', space=vmem, size = 0x4000, scoped, tag = 'input window, operand 4, single buffered']
    #allocation9 [shape = 'u8[1024]{0}', space=vmem, size = 0x400, scoped, tag = 'output window, operand 0, single buffered']
    %11 = vsyncpa [#allocation4], 0
    %12 = vsyncpa [#allocation7], 0
    %s13 = scalar_lea.sflag [#allocation7], 1
    %14 = vsyncpa %s13, 0
    %15 = vsyncpa [#allocation5], 0
    loop: start=0, step=1, limit=4
    $region2: #{tpu_custom_call.1} parent=1 // loop_pre_header
      _
    $region3: #{tpu_custom_call.1} parent=1 // loop_header
      %s17 = sphi 0, %s21
      %p18 = scmp.ge.s32.totalorder %s17, 4
      %s24 = sphi 0, %s36
      %s25 = sphi 0, %s32
      %s26 = sphi 0, %s24
      %s27 = sphi 0, %s25
      %s28 = sphi 0, %s26
      %s29 = sphi 0, %s27
      %s39 = sphi 0, %s41
      %s42 = sphi 0, %s39
      %s43 = sphi 0, %s42
      %s59 = sphi 0, %s43
      %s65 = sphi 0, %s67
      %s68 = sphi 0, %s65
      %s69 = sphi 0, %s68
      %s85 = sphi 0, %s69
      %s89 = sphi 0, %s89
      %s91 = sphi 0, %s89
      %s92 = sphi 0, %s91
      %s106 = sphi 0, %s92
      %s110 = sphi 0, %s110
      %s112 = sphi 0, %s110
      %s113 = sphi 0, %s112
      %s127 = sphi 0, %s113
      %s131 = sphi 0, %s131
      %s133 = sphi 0, %s131
      %s134 = sphi 0, %s133
      %s148 = sphi 0, %s134
      %s152 = sphi 0, %s152
      %s154 = sphi 0, %s152
      %s155 = sphi 0, %s154
      %s169 = sphi 0, %s155
      %s175 = sphi 0, %s177
      %s178 = sphi 0, %s175
      %s179 = sphi 0, %s178
      %s195 = sphi 0, %s179
    $region4: #{tpu_custom_call.1} parent=1 // loop_header_branch
      %20 = sbr.rel (%p18) target = $region8
    $region5: #{tpu_custom_call.1} parent=1 // loop_body
      %s22 = ssub.s32 %s17, 1
      %s23 = ssub.s32 %s17, 2
      %s30 = sadd.s32 1, %s25
      %p31 = scmp.ge.s32.totalorder %s30, 2
      %s32 = scalar_select %p31, 0, %s30
      %s33 = sadd.s32 1, %s24
      %s34 = scalar_select %p31, %s33, %s24
      %p35 = scmp.ge.s32.totalorder %s34, 1
      %s36 = scalar_select %p35, 0, %s34
      %s37 = ssub.s32 %s24, %s36
      %p38 = scmp.eq.s32.totalorder %s37, 0
      %s40 = sadd.s32 %s39, 1
      %s41 = scalar_select %p38, %s39, %s40
      %p44 = pneg %p38
      %p45 = scmp.eq.s32.totalorder %s17, 1
      %p46 = por %p44, %p45
      %p47 = scmp.ne.s32.totalorder %s39, %s42
      %p48 = scmp.eq.s32.totalorder %s17, 0
      %p49 = por %p47, %p48
      %p50 = scmp.ne.s32.totalorder %s39, %s42
      %p51 = scmp.eq.s32.totalorder %s22, 1
      %p52 = por %p50, %p51
      %p53 = scmp.ne.s32.totalorder %s42, %s43
      %p54 = scmp.eq.s32.totalorder %s22, 0
      %p55 = por %p53, %p54
      %p56 = scmp.ne.s32.totalorder %s42, %s43
      %p57 = scmp.eq.s32.totalorder %s23, 1
      %p58 = por %p56, %p57
      %p60 = scmp.ne.s32.totalorder %s43, %s59
      %p61 = scmp.eq.s32.totalorder %s23, 0
      %p62 = por %p60, %p61
      %s63 = ssub.s32 %s25, %s32
      %p64 = scmp.eq.s32.totalorder %s63, 0
      %s66 = sadd.s32 %s65, 1
      %s67 = scalar_select %p64, %s65, %s66
      %p70 = pneg %p64
      %p71 = scmp.eq.s32.totalorder %s17, 1
      %p72 = por %p70, %p71
      %p73 = scmp.ne.s32.totalorder %s65, %s68
      %p74 = scmp.eq.s32.totalorder %s17, 0
      %p75 = por %p73, %p74
      %p76 = scmp.ne.s32.totalorder %s65, %s68
      %p77 = scmp.eq.s32.totalorder %s22, 1
      %p78 = por %p76, %p77
      %p79 = scmp.ne.s32.totalorder %s68, %s69
      %p80 = scmp.eq.s32.totalorder %s22, 0
      %p81 = por %p79, %p80
      %p82 = scmp.ne.s32.totalorder %s68, %s69
      %p83 = scmp.eq.s32.totalorder %s23, 1
      %p84 = por %p82, %p83
      %p86 = scmp.ne.s32.totalorder %s69, %s85
      %p87 = scmp.eq.s32.totalorder %s23, 0
      %p88 = por %p86, %p87
      %s90 = sadd.s32 %s89, 1
      %p93 = scmp.eq.s32.totalorder %s17, 1
      %p94 = scmp.ne.s32.totalorder %s89, %s91
      %p95 = scmp.eq.s32.totalorder %s17, 0
      %p96 = por %p94, %p95
      %p97 = scmp.ne.s32.totalorder %s89, %s91
      %p98 = scmp.eq.s32.totalorder %s22, 1
      %p99 = por %p97, %p98
      %p100 = scmp.ne.s32.totalorder %s91, %s92
      %p101 = scmp.eq.s32.totalorder %s22, 0
      %p102 = por %p100, %p101
      %p103 = scmp.ne.s32.totalorder %s91, %s92
      %p104 = scmp.eq.s32.totalorder %s23, 1
      %p105 = por %p103, %p104
      %p107 = scmp.ne.s32.totalorder %s92, %s106
      %p108 = scmp.eq.s32.totalorder %s23, 0
      %p109 = por %p107, %p108
      %s111 = sadd.s32 %s110, 1
      %p114 = scmp.eq.s32.totalorder %s17, 1
      %p115 = scmp.ne.s32.totalorder %s110, %s112
      %p116 = scmp.eq.s32.totalorder %s17, 0
      %p117 = por %p115, %p116
      %p118 = scmp.ne.s32.totalorder %s110, %s112
      %p119 = scmp.eq.s32.totalorder %s22, 1
      %p120 = por %p118, %p119
      %p121 = scmp.ne.s32.totalorder %s112, %s113
      %p122 = scmp.eq.s32.totalorder %s22, 0
      %p123 = por %p121, %p122
      %p124 = scmp.ne.s32.totalorder %s112, %s113
      %p125 = scmp.eq.s32.totalorder %s23, 1
      %p126 = por %p124, %p125
      %p128 = scmp.ne.s32.totalorder %s113, %s127
      %p129 = scmp.eq.s32.totalorder %s23, 0
      %p130 = por %p128, %p129
      %s132 = sadd.s32 %s131, 1
      %p135 = scmp.eq.s32.totalorder %s17, 1
      %p136 = scmp.ne.s32.totalorder %s131, %s133
      %p137 = scmp.eq.s32.totalorder %s17, 0
      %p138 = por %p136, %p137
      %p139 = scmp.ne.s32.totalorder %s131, %s133
      %p140 = scmp.eq.s32.totalorder %s22, 1
      %p141 = por %p139, %p140
      %p142 = scmp.ne.s32.totalorder %s133, %s134
      %p143 = scmp.eq.s32.totalorder %s22, 0
      %p144 = por %p142, %p143
      %p145 = scmp.ne.s32.totalorder %s133, %s134
      %p146 = scmp.eq.s32.totalorder %s23, 1
      %p147 = por %p145, %p146
      %p149 = scmp.ne.s32.totalorder %s134, %s148
      %p150 = scmp.eq.s32.totalorder %s23, 0
      %p151 = por %p149, %p150
      %s153 = sadd.s32 %s152, 1
      %p156 = scmp.eq.s32.totalorder %s17, 1
      %p157 = scmp.ne.s32.totalorder %s152, %s154
      %p158 = scmp.eq.s32.totalorder %s17, 0
      %p159 = por %p157, %p158
      %p160 = scmp.ne.s32.totalorder %s152, %s154
      %p161 = scmp.eq.s32.totalorder %s22, 1
      %p162 = por %p160, %p161
      %p163 = scmp.ne.s32.totalorder %s154, %s155
      %p164 = scmp.eq.s32.totalorder %s22, 0
      %p165 = por %p163, %p164
      %p166 = scmp.ne.s32.totalorder %s154, %s155
      %p167 = scmp.eq.s32.totalorder %s23, 1
      %p168 = por %p166, %p167
      %p170 = scmp.ne.s32.totalorder %s155, %s169
      %p171 = scmp.eq.s32.totalorder %s23, 0
      %p172 = por %p170, %p171
      %s173 = ssub.s32 %s24, %s36
      %p174 = scmp.eq.s32.totalorder %s173, 0
      %s176 = sadd.s32 %s175, 1
      %s177 = scalar_select %p174, %s175, %s176
      %p180 = pneg %p174
      %p181 = scmp.eq.s32.totalorder %s17, 1
      %p182 = por %p180, %p181
      %p183 = scmp.ne.s32.totalorder %s175, %s178
      %p184 = scmp.eq.s32.totalorder %s17, 0
      %p185 = por %p183, %p184
      %p186 = scmp.ne.s32.totalorder %s175, %s178
      %p187 = scmp.eq.s32.totalorder %s22, 1
      %p188 = por %p186, %p187
      %p189 = scmp.ne.s32.totalorder %s178, %s179
      %p190 = scmp.eq.s32.totalorder %s22, 0
      %p191 = por %p189, %p190
      %p192 = scmp.ne.s32.totalorder %s178, %s179
      %p193 = scmp.eq.s32.totalorder %s23, 1
      %p194 = por %p192, %p193
      %p196 = scmp.ne.s32.totalorder %s179, %s195
      %p197 = scmp.eq.s32.totalorder %s23, 0
      %p198 = por %p196, %p197
      %p199 = scmp.le.s32.totalorder 1, %s17
      %p200 = scmp.lt.s32.totalorder %s17, 3
      %p201 = pnand %p199, %p200
      %p202 = pneg %p201
      // Predicated region
      $region9: #{tpu_custom_call.1} parent=5 // pred_check
        _
      $region10: #{tpu_custom_call.1} parent=5 // pred_check_branch
        %204 = sbr.rel (%p201) target = $region12
      $region11: #{tpu_custom_call.1} parent=5 // pred_region
        %s205 = ssub.s32 %s17, 1
        // Predicated region
        $region13: #{tpu_custom_call.1} parent=11 // pred_check
          %p206 = pneg %p55
        $region14: #{tpu_custom_call.1} parent=11 // pred_check_branch
          %208 = sbr.rel (%p206) target = $region16
        $region15: #{tpu_custom_call.1} parent=11 // pred_region
          %s209 = smul.u32 2, %s26
          %s211 = ssub.s32 256, 256
          %212 = vsyncadd [#allocation4], %s211
          %s213 = smul.addr %s209, 128
          %s214 = scalar_lea.hbm %s0, %s213
          %s215 = sshll.u32 [#allocation3], 4
          %s216 = int_to_ptr.vmem [resolvable:$true] %s215
          %221 = dma.hbm_to_vmem [thread:$0]  %s214, 256, %s216, [#allocation4], 128, 128, 8
        $region16: #{tpu_custom_call.1} parent=11 // pred_fallthru
          _
        // Predicated region
        $region17: #{tpu_custom_call.1} parent=11 // pred_check
          %p222 = pneg %p102
        $region18: #{tpu_custom_call.1} parent=11 // pred_check_branch
          %224 = sbr.rel (%p222) target = $region20
        $region19: #{tpu_custom_call.1} parent=11 // pred_region
          _
        $region20: #{tpu_custom_call.1} parent=11 // pred_fallthru
          _
        // Predicated region
        $region21: #{tpu_custom_call.1} parent=11 // pred_check
          %p225 = pneg %p123
        $region22: #{tpu_custom_call.1} parent=11 // pred_check_branch
          %227 = sbr.rel (%p225) target = $region24
        $region23: #{tpu_custom_call.1} parent=11 // pred_region
          _
        $region24: #{tpu_custom_call.1} parent=11 // pred_fallthru
          _
        // Predicated region
        $region25: #{tpu_custom_call.1} parent=11 // pred_check
          %p228 = pneg %p144
        $region26: #{tpu_custom_call.1} parent=11 // pred_check_branch
          %230 = sbr.rel (%p228) target = $region28
        $region27: #{tpu_custom_call.1} parent=11 // pred_region
          %s232 = ssub.s32 512, 512
          %233 = vsyncadd [#allocation7], %s232
          %s234 = sshll.u32 [#allocation8], 4
          %s235 = int_to_ptr.vmem [resolvable:$true] %s234
          %240 = dma.hbm_to_vmem [thread:$0]  %s4, 512, %s235, [#allocation7], 128, 128, 8
        $region28: #{tpu_custom_call.1} parent=11 // pred_fallthru
          _
        // Predicated region
        $region29: #{tpu_custom_call.1} parent=11 // pred_check
          %p241 = pneg %p165
        $region30: #{tpu_custom_call.1} parent=11 // pred_check_branch
          %243 = sbr.rel (%p241) target = $region32
        $region31: #{tpu_custom_call.1} parent=11 // pred_region
          _
        $region32: #{tpu_custom_call.1} parent=11 // pred_fallthru
          _
      $region12: #{tpu_custom_call.1} parent=5 // pred_fallthru
        _
      %p244 = scmp.lt.s32.totalorder %s17, 2
      // Predicated region
      $region33: #{tpu_custom_call.1} parent=5 // pred_check
        %p245 = pneg %p244
      $region34: #{tpu_custom_call.1} parent=5 // pred_check_branch
        %247 = sbr.rel (%p245) target = $region36
      $region35: #{tpu_custom_call.1} parent=5 // pred_region
        // Predicated region
        $region37: #{tpu_custom_call.1} parent=35 // pred_check
          %p248 = pneg %p75
        $region38: #{tpu_custom_call.1} parent=35 // pred_check_branch
          %250 = sbr.rel (%p248) target = $region40
        $region39: #{tpu_custom_call.1} parent=35 // pred_region
          %s251 = sand.u32 %s17, 1
          %s252 = scalar_lea.sflag [#allocation7], %s251
          %s253 = sand.u32 %s65, 1
          %s254 = smul.addr %s253, 32
          %s255 = scalar_lea.vmem [#allocation6], %s254
          %s257 = ssub.s32 512, 512
          %258 = vsyncadd %s252, %s257
          %s259 = smul.addr %s25, 8
          %s260 = smul.addr %s259, 64
          %s261 = scalar_lea.hbm %s1, %s260
          %s262 = sshll.u32 %s255, 4
          %s263 = int_to_ptr.vmem [resolvable:$true] %s262
          %268 = dma.hbm_to_vmem [thread:$0]  %s261, 512, %s263, %s252, 64, 64, 4
        $region40: #{tpu_custom_call.1} parent=35 // pred_fallthru
          _
      $region36: #{tpu_custom_call.1} parent=5 // pred_fallthru
        _
      %p269 = scmp.le.s32.totalorder 1, %s17
      %p270 = scmp.lt.s32.totalorder %s17, 3
      %p271 = pnand %p269, %p270
      %p272 = pneg %p271
      // Predicated region
      $region41: #{tpu_custom_call.1} parent=5 // pred_check
        _
      $region42: #{tpu_custom_call.1} parent=5 // pred_check_branch
        %274 = sbr.rel (%p271) target = $region44
      $region43: #{tpu_custom_call.1} parent=5 // pred_region
        %s275 = ssub.s32 %s17, 1
        // Predicated region
        $region45: #{tpu_custom_call.1} parent=43 // pred_check
          %p276 = pneg %p55
        $region46: #{tpu_custom_call.1} parent=43 // pred_check_branch
          %278 = sbr.rel (%p276) target = $region48
        $region47: #{tpu_custom_call.1} parent=43 // pred_region
          %279 = dma.done [#allocation4], 256
        $region48: #{tpu_custom_call.1} parent=43 // pred_fallthru
          _
        %s280 = sand.u32 %s22, 1
        %s281 = scalar_lea.sflag [#allocation7], %s280
        %s282 = sand.u32 %s68, 1
        %s283 = smul.addr %s282, 32
        %s284 = scalar_lea.vmem [#allocation6], %s283
        // Predicated region
        $region49: #{tpu_custom_call.1} parent=43 // pred_check
          %p285 = pneg %p81
        $region50: #{tpu_custom_call.1} parent=43 // pred_check_branch
          %287 = sbr.rel (%p285) target = $region52
        $region51: #{tpu_custom_call.1} parent=43 // pred_region
          %288 = dma.done %s281, 512
        $region52: #{tpu_custom_call.1} parent=43 // pred_fallthru
          _
        // Predicated region
        $region53: #{tpu_custom_call.1} parent=43 // pred_check
          %p289 = pneg %p144
        $region54: #{tpu_custom_call.1} parent=43 // pred_check_branch
          %291 = sbr.rel (%p289) target = $region56
        $region55: #{tpu_custom_call.1} parent=43 // pred_region
          %292 = dma.done [#allocation7], 512
        $region56: #{tpu_custom_call.1} parent=43 // pred_fallthru
          _
        %p293 = pneg %p55
        %p294 = pneg %p52
        %s295 = sand.u32 %s22, 1
        %s296 = scalar_lea.sflag [#allocation7], %s295
        %s297 = sand.u32 %s68, 1
        %s298 = smul.addr %s297, 32
        %s299 = scalar_lea.vmem [#allocation6], %s298
        %p300 = pneg %p81
        %p301 = pneg %p78
        %p302 = pneg %p102
        %p303 = pneg %p99
        %p304 = pneg %p123
        %p305 = pneg %p120
        %p306 = pneg %p144
        %p307 = pneg %p141
        %p308 = pneg %p165
        %p309 = pneg %p162
        %p310 = pneg %p191
        %p311 = pneg %p188
        %s312 = smul.u32 2, %s26
        %p314 = scmp.eq.s32.totalorder %s27, 0
        // Predicated region
        $region57: #{tpu_custom_call.1} parent=43 // pred_check
          %p315 = pneg %p314
        $region58: #{tpu_custom_call.1} parent=43 // pred_check_branch
          %317 = sbr.rel (%p315) target = $region60
        $region59: #{tpu_custom_call.1} parent=43 // pred_region
          %v318 = vld [vmem:[#allocation3] sm:$0xff]
          %v319 = vld [vmem:[#allocation3 + $0x8] sm:$0xff]
          %vm320 = vcmask 261120
          %321 = vst.msk [vmem:[#allocation2] sm:$0xff] %vm320, %v318
          %322 = vst.msk [vmem:[#allocation2 + $0x8] sm:$0xff] %vm320, %v319
        $region60: #{tpu_custom_call.1} parent=43 // pred_fallthru
          _
        %v323 = vld [vmem:[#allocation2] sm:$0xff]
        %v324 = vld [vmem:[#allocation2 + $0x8] sm:$0xff]
        %v325 = vpack.c.bf16 %v324, %v323
        %v326 = vld [vmem:[%s284] sm:$0xf]
        %v327 = vld [vmem:[%s284 + $0x4] sm:$0xf]
        %v328 = vld [vmem:[%s284 + $0x8] sm:$0xf]
        %v329 = vld [vmem:[%s284 + $0xc] sm:$0xf]
        %v334 = vunpack.c.l.b16 %v326
        %v335 = vunpack.c.l.b16 %v327
        %v336 = vunpack.c.l.b16 %v328
        %v337 = vunpack.c.l.b16 %v329
        %v338 = vpack.c.b16 %v335, %v334
        %v339 = vpack.c.b16 %v337, %v336
        %vm342 = vcmask 261120
        %v344 = vsel %vm342, %v325, 0
        %346 = vmatprep.subr.bf16.mxu0 0
        %347 = vmatpush1.bf16.msra.mxu0 %v338
        %348 = vmatprep.subr.bf16.mxu0 0
        %349 = vmatpush1.bf16.msra.mxu0 %v339
        %350 = vmatprep.subr.bf16.mxu0 0
        %351 = vmatpush1.bf16.msra.mxu0 0
        %352 = vmatprep.subr.bf16.mxu0 0
        %353 = vmatpush1.bf16.msra.mxu0 0
        %354 = vmatprep.subr.bf16.mxu0 0
        %355 = vmatpush1.bf16.msra.mxu0 0
        %356 = vmatprep.subr.bf16.mxu0 0
        %357 = vmatpush1.bf16.msra.mxu0 0
        %358 = vmatprep.subr.bf16.mxu0 0
        %359 = vmatpush1.bf16.msra.mxu0 0
        %360 = vmatprep.subr.bf16.mxu0 0
        %361 = vmatpush1.bf16.msra.mxu0 0
        %362 = vmatprep.subr.bf16.mxu0 0
        %363 = vmatpush1.bf16.msra.mxu0 0
        %364 = vmatprep.subr.bf16.mxu0 0
        %365 = vmatpush1.bf16.msra.mxu0 0
        %366 = vmatprep.subr.bf16.mxu0 0
        %367 = vmatpush1.bf16.msra.mxu0 0
        %368 = vmatprep.subr.bf16.mxu0 0
        %369 = vmatpush1.bf16.msra.mxu0 0
        %370 = vmatprep.subr.bf16.mxu0 0
        %371 = vmatpush1.bf16.msra.mxu0 0
        %372 = vmatprep.subr.bf16.mxu0 0
        %373 = vmatpush1.bf16.msra.mxu0 0
        %374 = vmatprep.subr.bf16.mxu0 0
        %375 = vmatpush1.bf16.msra.mxu0 0
        %376 = vmatprep.subr.bf16.mxu0 0
        %377 = vmatpush1.bf16.msra.mxu0 0
        %378 = vmatprep.mubr.bf16.mxu0 0
        %379 = vmatmul.mubr.bf16.gmra.mrb[0].mxu0 %v344
        %v380 = vpop.f32.mrb[0].mxu0
        %v381 = vadd.f32 0.0, %v380
        %v382 = vpop.f32.mrb[0].mxu0
        %v383 = vpop.f32.mrb[0].mxu0
        %v384 = vadd.f32 0.0, %v383
        %v385 = vpop.f32.mrb[0].mxu0
        %386 = vdwg.mxu0
        %v387 = vxor.u32 %v381, 2147483648
        %v388 = vxor.u32 %v384, 2147483648
        %v389 = vmul.f32 %v387, 1.442695
        %v390 = vpow.pop %v389
        %v391 = vmul.f32 %v388, 1.442695
        %v392 = vpow.pop %v391
        %v393 = vadd.f32 %v390, 1.0
        %v394 = vadd.f32 %v392, 1.0
        %v395 = vrcp.pop %v393
        %v396 = vmul.f32 1.0, %v395
        %v397 = vrcp.pop %v394
        %v398 = vmul.f32 1.0, %v397
        %s399 = scalar_lea.vmem %s284, 16 [#allocation6]
        %v400 = vld [vmem:[%s399] sm:$0xf]
        %v401 = vld [vmem:[%s399 + $0x4] sm:$0xf]
        %v402 = vld [vmem:[%s399 + $0x8] sm:$0xf]
        %v403 = vld [vmem:[%s399 + $0xc] sm:$0xf]
        %v408 = vunpack.c.l.b16 %v400
        %v409 = vunpack.c.l.b16 %v401
        %v410 = vunpack.c.l.b16 %v402
        %v411 = vunpack.c.l.b16 %v403
        %v412 = vpack.c.b16 %v409, %v408
        %v413 = vpack.c.b16 %v411, %v410
        %416 = vmatprep.subr.bf16.mxu0 0
        %417 = vmatpush1.bf16.msra.mxu0 %v412
        %418 = vmatprep.subr.bf16.mxu0 0
        %419 = vmatpush1.bf16.msra.mxu0 %v413
        %420 = vmatprep.subr.bf16.mxu0 0
        %421 = vmatpush1.bf16.msra.mxu0 0
        %422 = vmatprep.subr.bf16.mxu0 0
        %423 = vmatpush1.bf16.msra.mxu0 0
        %424 = vmatprep.subr.bf16.mxu0 0
        %425 = vmatpush1.bf16.msra.mxu0 0
        %426 = vmatprep.subr.bf16.mxu0 0
        %427 = vmatpush1.bf16.msra.mxu0 0
        %428 = vmatprep.subr.bf16.mxu0 0
        %429 = vmatpush1.bf16.msra.mxu0 0
        %430 = vmatprep.subr.bf16.mxu0 0
        %431 = vmatpush1.bf16.msra.mxu0 0
        %432 = vmatprep.subr.bf16.mxu0 0
        %433 = vmatpush1.bf16.msra.mxu0 0
        %434 = vmatprep.subr.bf16.mxu0 0
        %435 = vmatpush1.bf16.msra.mxu0 0
        %436 = vmatprep.subr.bf16.mxu0 0
        %437 = vmatpush1.bf16.msra.mxu0 0
        %438 = vmatprep.subr.bf16.mxu0 0
        %439 = vmatpush1.bf16.msra.mxu0 0
        %440 = vmatprep.subr.bf16.mxu0 0
        %441 = vmatpush1.bf16.msra.mxu0 0
        %442 = vmatprep.subr.bf16.mxu0 0
        %443 = vmatpush1.bf16.msra.mxu0 0
        %444 = vmatprep.subr.bf16.mxu0 0
        %445 = vmatpush1.bf16.msra.mxu0 0
        %446 = vmatprep.subr.bf16.mxu0 0
        %447 = vmatpush1.bf16.msra.mxu0 0
        %448 = vmatprep.mubr.bf16.mxu0 0
        %449 = vmatmul.mubr.bf16.gmra.mrb[0].mxu0 %v344
        %v450 = vpop.f32.mrb[0].mxu0
        %v451 = vadd.f32 0.0, %v450
        %v452 = vpop.f32.mrb[0].mxu0
        %v453 = vpop.f32.mrb[0].mxu0
        %v454 = vadd.f32 0.0, %v453
        %v455 = vpop.f32.mrb[0].mxu0
        %456 = vdwg.mxu0
        %v457 = vsub.f32 1.0, %v396
        %v458 = vsub.f32 1.0, %v398
        %v459 = vmul.f32 %v396, %v451
        %v460 = vmul.f32 %v398, %v454
        %v461 = vlaneseq
        %v462 = vshrl.u32 %v461, 7
        %vm463 = vcmp.ge.s32.totalorder %v462, 1
        %v464 = vrot.slane %v457, 7
        %v465 = vrot.slane %v458, 7
        %v466 = vsel %vm463, 1, 0
        %vm467 = vcmp.eq.s32.totalorder %v466, 1
        %v468 = vsel %vm467, %v464, 1.0
        %v469 = vsel %vm467, %v465, 1.0
        %v470 = vrot.slane %v459, 7
        %v471 = vrot.slane %v460, 7
        %v472 = vsel %vm467, %v470, 0.0
        %v473 = vsel %vm467, %v471, 0.0
        %v474 = vmul.f32 %v457, %v472
        %v475 = vmul.f32 %v458, %v473
        %v476 = vadd.f32 %v459, %v474
        %v477 = vadd.f32 %v460, %v475
        %v478 = vmul.f32 %v457, %v468
        %v479 = vmul.f32 %v458, %v469
        %vm480 = vcmp.ge.s32.totalorder %v462, 2
        %v481 = vrot.slane %v478, 6
        %v482 = vrot.slane %v479, 6
        %v483 = vsel %vm480, 1, 0
        %vm484 = vcmp.eq.s32.totalorder %v483, 1
        %v485 = vsel %vm484, %v481, 1.0
        %v486 = vsel %vm484, %v482, 1.0
        %v487 = vrot.slane %v476, 6
        %v488 = vrot.slane %v477, 6
        %v489 = vsel %vm484, %v487, 0.0
        %v490 = vsel %vm484, %v488, 0.0
        %v491 = vmul.f32 %v478, %v489
        %v492 = vmul.f32 %v479, %v490
        %v493 = vadd.f32 %v476, %v491
        %v494 = vadd.f32 %v477, %v492
        %v495 = vmul.f32 %v478, %v485
        %v496 = vmul.f32 %v479, %v486
        %vm497 = vcmp.ge.s32.totalorder %v462, 4
        %v498 = vrot.slane %v493, 4
        %v499 = vrot.slane %v494, 4
        %v500 = vsel %vm497, 1, 0
        %vm501 = vcmp.eq.s32.totalorder %v500, 1
        %v502 = vsel %vm501, %v498, 0.0
        %v503 = vsel %vm501, %v499, 0.0
        %v504 = vmul.f32 %v495, %v502
        %v505 = vmul.f32 %v496, %v503
        %v506 = vadd.f32 %v493, %v504
        %v507 = vadd.f32 %v494, %v505
        %v508 = vadd.f32 %v323, %v506
        %v509 = vadd.f32 %v324, %v507
        %510 = vst.msk [vmem:[#allocation2] sm:$0xff] %vm342, %v508
        %511 = vst.msk [vmem:[#allocation2 + $0x8] sm:$0xff] %vm342, %v509
        %p512 = scmp.eq.s32.totalorder %s27, 1
        // Predicated region
        $region61: #{tpu_custom_call.1} parent=43 // pred_check
          %p513 = pneg %p512
        $region62: #{tpu_custom_call.1} parent=43 // pred_check_branch
          %515 = sbr.rel (%p513) target = $region64
        $region63: #{tpu_custom_call.1} parent=43 // pred_region
          %v518 = vrot.slane %v509, 7
          %vm521 = vcmask 261127
          %v522 = vsel %vm521, %v508, 0.0
          %523 = vadd.xlane.f32.xlu0 %v522
          %v524 = vpop.xlane.xlu0 %523
          %vm525 = vcmask 253952
          %v526 = vsel %vm525, %v518, 0.0
          %527 = vadd.xlane.f32.xlu0 %v526
          %v528 = vpop.xlane.xlu0 %527
          %v529 = vrcp.pop 32.0
          %v530 = vmul.f32 %v524, %v529
          %v531 = vmul.f32 %v528, %v529
          %v534 = vrot.slane %v531, 1
          %v537 = vsub.f32 %v508, %v530
          %v538 = vsub.f32 %v509, %v534
          %v539 = vmul.f32 %v537, %v537
          %v540 = vmul.f32 %v538, %v538
          %v543 = vrot.slane %v540, 7
          %v546 = vsel %vm521, %v539, 0.0
          %547 = vadd.xlane.f32.xlu0 %v546
          %v548 = vpop.xlane.xlu0 %547
          %v549 = vsel %vm525, %v543, 0.0
          %550 = vadd.xlane.f32.xlu0 %v549
          %v551 = vpop.xlane.xlu0 %550
          %v552 = vmul.f32 %v548, %v529
          %v553 = vmul.f32 %v551, %v529
          %v554 = vadd.f32 %v552, 1e-05
          %v555 = vadd.f32 %v553, 1e-05
          %v556 = vrsqrt.pop %v554
          %v557 = vrsqrt.pop %v555
          %v560 = vrot.slane %v557, 1
          %v563 = vmul.f32 %v537, %v556
          %v564 = vmul.f32 %v538, %v560
          %v565 = vld [vmem:[%s2] sm:$0x1]
          %v567 = vlaneseq
          %v568 = vshrl.u32 %v567, 7
          %v569 = vsub.s32 0, %v568
          %v570 = vrot.slane %v565, %v569
          %v572 = vmul.f32 %v563, %v570
          %v573 = vmul.f32 %v564, %v570
          %v574 = vld [vmem:[%s3] sm:$0x1]
          %v576 = vlaneseq
          %v577 = vshrl.u32 %v576, 7
          %v578 = vsub.s32 0, %v577
          %v579 = vrot.slane %v574, %v578
          %v581 = vadd.f32 %v572, %v579
          %v582 = vadd.f32 %v573, %v579
          %v583 = vld [vmem:[#allocation8] sm:$0xff]
          %v584 = vld [vmem:[#allocation8 + $0x8] sm:$0xff]
          %v585 = vld [vmem:[#allocation8 + $0x10] sm:$0xff]
          %v586 = vld [vmem:[#allocation8 + $0x18] sm:$0xff]
          %v587 = vld [vmem:[%s5] sm:$0x1]
          %v589 = vlaneseq
          %v590 = vshrl.u32 %v589, 7
          %v591 = vsub.s32 0, %v590
          %v592 = vrot.slane %v587, %v591
          %v596 = vrot.slane %v581, 7
          %v597 = vrot.slane %v582, 6
          %vm598 = vcmask 1041409
          %v599 = vsel %vm598, %v597, %v596
          %v600 = vsel %vm342, %v599, 0
          %602 = vmatprep.subr.mxu0 0.0
          %603 = vmatpush1.msra.mxu0 %v583
          %604 = vmatprep.subr.mxu0 0.0
          %605 = vmatpush1.msra.mxu0 %v584
          %606 = vmatprep.subr.mxu0 0.0
          %607 = vmatpush1.msra.mxu0 %v585
          %608 = vmatprep.subr.mxu0 0.0
          %609 = vmatpush1.msra.mxu0 %v586
          %610 = vmatprep.subr.mxu0 0.0
          %611 = vmatpush1.msra.mxu0 0.0
          %612 = vmatprep.subr.mxu0 0.0
          %613 = vmatpush1.msra.mxu0 0.0
          %614 = vmatprep.subr.mxu0 0.0
          %615 = vmatpush1.msra.mxu0 0.0
          %616 = vmatprep.subr.mxu0 0.0
          %617 = vmatpush1.msra.mxu0 0.0
          %618 = vmatprep.subr.mxu0 0.0
          %619 = vmatpush1.msra.mxu0 0.0
          %620 = vmatprep.subr.mxu0 0.0
          %621 = vmatpush1.msra.mxu0 0.0
          %622 = vmatprep.subr.mxu0 0.0
          %623 = vmatpush1.msra.mxu0 0.0
          %624 = vmatprep.subr.mxu0 0.0
          %625 = vmatpush1.msra.mxu0 0.0
          %626 = vmatprep.subr.mxu0 0.0
          %627 = vmatpush1.msra.mxu0 0.0
          %628 = vmatprep.subr.mxu0 0.0
          %629 = vmatpush1.msra.mxu0 0.0
          %630 = vmatprep.subr.mxu0 0.0
          %631 = vmatpush1.msra.mxu0 0.0
          %632 = vmatprep.subr.mxu0 0.0
          %633 = vmatpush1.msra.mxu0 0.0
          %634 = vmatprep.subr.mxu0 0.0
          %635 = vmatpush1.msra.mxu0 0.0
          %636 = vmatprep.subr.mxu0 0.0
          %637 = vmatpush1.msra.mxu0 0.0
          %638 = vmatprep.subr.mxu0 0.0
          %639 = vmatpush1.msra.mxu0 0.0
          %640 = vmatprep.subr.mxu0 0.0
          %641 = vmatpush1.msra.mxu0 0.0
          %642 = vmatprep.subr.mxu0 0.0
          %643 = vmatpush1.msra.mxu0 0.0
          %644 = vmatprep.subr.mxu0 0.0
          %645 = vmatpush1.msra.mxu0 0.0
          %646 = vmatprep.subr.mxu0 0.0
          %647 = vmatpush1.msra.mxu0 0.0
          %648 = vmatprep.subr.mxu0 0.0
          %649 = vmatpush1.msra.mxu0 0.0
          %650 = vmatprep.subr.mxu0 0.0
          %651 = vmatpush1.msra.mxu0 0.0
          %652 = vmatprep.subr.mxu0 0.0
          %653 = vmatpush1.msra.mxu0 0.0
          %654 = vmatprep.subr.mxu0 0.0
          %655 = vmatpush1.msra.mxu0 0.0
          %656 = vmatprep.subr.mxu0 0.0
          %657 = vmatpush1.msra.mxu0 0.0
          %658 = vmatprep.subr.mxu0 0.0
          %659 = vmatpush1.msra.mxu0 0.0
          %660 = vmatprep.subr.mxu0 0.0
          %661 = vmatpush1.msra.mxu0 0.0
          %662 = vmatprep.subr.mxu0 0.0
          %663 = vmatpush1.msra.mxu0 0.0
          %664 = vmatprep.subr.mxu0 0.0
          %665 = vmatpush1.msra.mxu0 0.0
          %666 = vmatprep.mubr.f32.mxu0 0.0
          %667 = vmatmul.mubr.f32.gmra.mrb[0].mxu0 %v600
          %v668 = vpop.f32.mrb[0].mxu0
          %v669 = vadd.f32 %v592, %v668
          %v670 = vpop.f32.mrb[0].mxu0
          %671 = vdwg.mxu0
          %672 = vst [vmem:[#allocation9] sm:$0x3] %v669
        $region64: #{tpu_custom_call.1} parent=43 // pred_fallthru
          _
        // Predicated region
        $region65: #{tpu_custom_call.1} parent=43 // pred_check
          %p673 = pneg %p188
        $region66: #{tpu_custom_call.1} parent=43 // pred_check_branch
          %675 = sbr.rel (%p673) target = $region68
        $region67: #{tpu_custom_call.1} parent=43 // pred_region
          %s677 = ssub.s32 32, 32
          %678 = vsyncadd [#allocation5], %s677
          %s679 = smul.addr %s26, 32
          %s680 = scalar_lea.hbm %s6, %s679
          %s682 = sshll.u32 [#allocation9], 4
          %s683 = int_to_ptr.vmem [resolvable:$true] %s682
          %685 = dma.vmem_to_hbm [thread:$0]  %s683, 32, %s680, [#allocation5]
        $region68: #{tpu_custom_call.1} parent=43 // pred_fallthru
          _
        // Predicated region
        $region69: #{tpu_custom_call.1} parent=43 // pred_check
          %p686 = pneg %p188
        $region70: #{tpu_custom_call.1} parent=43 // pred_check_branch
          %688 = sbr.rel (%p686) target = $region72
        $region71: #{tpu_custom_call.1} parent=43 // pred_region
          %689 = dma.done [#allocation5], 32
        $region72: #{tpu_custom_call.1} parent=43 // pred_fallthru
          _
      $region44: #{tpu_custom_call.1} parent=5 // pred_fallthru
        _
      %p690 = scmp.le.s32.totalorder 2, %s17
      // Predicated region
      $region73: #{tpu_custom_call.1} parent=5 // pred_check
        %p691 = pneg %p690
      $region74: #{tpu_custom_call.1} parent=5 // pred_check_branch
        %693 = sbr.rel (%p691) target = $region76
      $region75: #{tpu_custom_call.1} parent=5 // pred_region
        %s694 = ssub.s32 %s17, 2
      $region76: #{tpu_custom_call.1} parent=5 // pred_fallthru
        _
    $region6: #{tpu_custom_call.1} parent=1 // loop_footer
      %s21 = sadd.s32 1, %s17
    $region7: #{tpu_custom_call.1} parent=1 // loop_footer_branch
      %16 = sbr.rel target = $region3
    $region8: #{tpu_custom_call.1} parent=1 // loop_exit
      _
    %695 = vsyncpa [#allocation4], 1
    %s696 = scalar_lea.sflag [#allocation4], 1
    %697 = vsyncpa %s696, 1
    %698 = vsyncpa [#allocation7], 1
    %s699 = scalar_lea.sflag [#allocation7], 1
    %700 = vsyncpa %s699, 1
    %701 = vsyncpa [#allocation5], 1
    %s702 = scalar_lea.sflag [#allocation5], 1
    %703 = vsyncpa %s702, 1

</llo_original>
